<compile_context>
chip_gen: v5e
topology: v5e:2x2
jax: 0.10.0
libtpu: 0.0.40
codegen_flags: <defaults>
</compile_context>

<pallas_src>
import jax
import jax.numpy as jnp
from jax.experimental import pallas as pl
from jax.experimental.pallas import tpu as pltpu


def atten_kernel(x_ref, w_ref, fcw_ref, fcb_ref, o_ref):
    # x_ref:   (TB, S, H)  block of batch rows (bf16 on v6e/v7x, else f32)
    # w_ref:   (H, 1)      attention vector as a column (f32)
    # fcw_ref: (H, C)      fc weight, pre-transposed (f32)
    # fcb_ref: (1, C)      fc bias (f32)
    # o_ref:   (TB, C)     output logits for this block of batch rows
    xv = x_ref[...]
    TB, S, H = xv.shape

    # M = tanh(x) in x's native dtype (bf16 stays bf16 on v6e/v7x).
    M = jnp.tanh(xv)

    # scores[b, s] = <M[b, s, :], w>  -> kept in (TB, S, 1) layout so the
    # softmax needs no lane-crossing relayout and alpha broadcasts against x.
    if S % 8 == 0:
        # MXU path: one (TB*S, H) x (H, 1) matmul, f32 accumulation. The two
        # reshapes only merge/split leading (sublane) dims (S % 8 == 0), the
        # lane dim is untouched.
        scores = jnp.dot(M.reshape(TB * S, H), w_ref[...].astype(M.dtype),
                         preferred_element_type=jnp.float32)       # (TB*S, 1)
        scores = scores.reshape(TB, S, 1)
    else:
        # Fallback (unaligned S): VALU multiply + lane reduce in f32.
        wv = w_ref[...].astype(jnp.float32).reshape(1, 1, H)
        scores = jnp.sum(M.astype(jnp.float32) * wv, axis=-1, keepdims=True)

    # softmax over the sequence axis (dim=1 in PyTorch), max-stabilized, f32.
    m = jnp.max(scores, axis=1, keepdims=True)          # (TB, 1, 1)
    e = jnp.exp(scores - m)                             # (TB, S, 1)
    denom = jnp.sum(e, axis=1, keepdims=True)           # (TB, 1, 1)
    alpha = e / denom                                   # exact divide (per-row, cheap)

    # Weighted pool over S: multiply in x's dtype, accumulate in f32, relu.
    prod = xv * alpha.astype(xv.dtype)                  # (TB, S, H)
    pooled = jnp.sum(prod.astype(jnp.float32), axis=1)  # (TB, H)
    pooled = jnp.maximum(pooled, 0.0)

    # Single batched FC matmul for all TB rows of this block.
    logits = jnp.dot(pooled, fcw_ref[...],
                     preferred_element_type=jnp.float32) + fcb_ref[...]
    o_ref[...] = logits.astype(o_ref.dtype)             # one (TB, C) store


def _round_up(n, m):
    return (n + m - 1) // m * m


def _pick_block_b(B, S, H, itemsize, vmem_budget_bytes):
    """Batch rows per grid step.

    Large blocks amortize the ~0.35us per-grid-step pipeline overhead. The
    double-buffered (block_b, S, H) input must stay well inside the scoped
    VMEM budget, block_b is capped at 256 rows to bound vreg pressure, and
    when B > 8 we keep >= 2 grid steps so the "parallel" axis can shard
    across v7x's two TensorCores.
    """
    if B <= 8:
        return B
    per_row = 2 * S * H * itemsize                    # double-buffered input bytes/row
    rows_fit = (vmem_budget_bytes // 2) // per_row    # leave half the budget as headroom
    rows_fit = max(8, (rows_fit // 8) * 8)
    block_b = min(256, rows_fit, _round_up(B, 8))
    if pl.cdiv(B, block_b) < 2:                       # >= 2 blocks for v7x's 2 TCs
        block_b = max(8, _round_up(pl.cdiv(B, 2), 8))
    return block_b


def atten_forward(x, w, fc_w, fc_b, *, block_b=None,
                  vmem_budget_bytes=32 * 1024 * 1024):
    """x: [B, S, H], w: [H], fc_w: [C, H] (PyTorch layout), fc_b: [C] -> [B, C]"""
    B, S, H = x.shape
    C = fc_b.shape[0]

    # v5e has no bf16 VPU/EUP: upcast bf16 inputs to f32 there. On v6e/v7x a
    # bf16 x halves HBM traffic for the dominant tensor, so keep it.
    if x.dtype == jnp.bfloat16:
        try:
            kind = jax.devices()[0].device_kind.lower()
        except Exception:
            kind = ""
        if ("v5 lite" in kind) or ("v5e" in kind) or ("v5lite" in kind):
            x = x.astype(jnp.float32)

    itemsize = jnp.dtype(x.dtype).itemsize
    if block_b is None:
        block_b = _pick_block_b(B, S, H, itemsize, vmem_budget_bytes)
    num_blocks = pl.cdiv(B, block_b)
    Bp = num_blocks * block_b
    if Bp != B:
        # Padded rows produce fc-bias-only logits and are sliced off below.
        x = jnp.pad(x, ((0, Bp - B), (0, 0), (0, 0)))

    w_col = w.reshape(H, 1).astype(jnp.float32)   # column vector for the MXU
    fcw_t = fc_w.T.astype(jnp.float32)            # (H, C): kernel does pooled @ W^T
    fcb2 = fc_b.reshape(1, C).astype(jnp.float32)

    out = pl.pallas_call(
        atten_kernel,
        out_shape=jax.ShapeDtypeStruct((Bp, C), jnp.float32),
        grid_spec=pltpu.PrefetchScalarGridSpec(
            num_scalar_prefetch=0,
            grid=(num_blocks,),
            in_specs=[
                pl.BlockSpec((block_b, S, H), lambda b: (b, 0, 0)),
                pl.BlockSpec((H, 1), lambda b: (0, 0)),
                pl.BlockSpec((H, C), lambda b: (0, 0)),
                pl.BlockSpec((1, C), lambda b: (0, 0)),
            ],
            out_specs=pl.BlockSpec((block_b, C), lambda b: (b, 0)),
        ),
        compiler_params=pltpu.CompilerParams(
            dimension_semantics=("parallel",),
            vmem_limit_bytes=vmem_budget_bytes,
        ),
    )(x, w_col, fcw_t, fcb2)
    return out[:B]


def atten_forward_ref(x, w, fc_w, fc_b):
    """Pure-JAX reference matching the PyTorch forward()."""
    M = jnp.tanh(x)
    scores = jnp.einsum("bsh,h->bs", M, w)
    alpha = jax.nn.softmax(scores, axis=1)[..., None]
    out = jnp.sum(x * alpha, axis=1)
    out = jax.nn.relu(out)
    return out @ fc_w.T + fc_b


if __name__ == "__main__":
    # config: hidden_size=32, num_labels=4; inputs: batch=2, seq=8
    B, S, H, C = 2, 8, 32, 4

    key = jax.random.PRNGKey(0)
    kx, kw, kfw, kfb = jax.random.split(key, 4)

    x = jax.random.normal(kx, (B, S, H), dtype=jnp.float32)
    # NOTE: the module initializes self.w to zeros; use small deterministic
    # nonzero values so the softmax path is actually exercised.
    w = 0.1 * jax.random.normal(kw, (H,), dtype=jnp.float32)
    fc_w = 0.1 * jax.random.normal(kfw, (C, H), dtype=jnp.float32)
    fc_b = 0.1 * jax.random.normal(kfb, (C,), dtype=jnp.float32)

    out = jax.block_until_ready(atten_forward(x, w, fc_w, fc_b))
    ref = atten_forward_ref(x, w, fc_w, fc_b)
    assert out.shape == (B, C)
    # Softmax divide is now exact (approx reciprocal removed). Remaining
    # tolerance covers possible bf16-pass rounding of the two small f32 MXU
    # matmuls vs. the XLA f32 reference.
    assert jnp.allclose(out, ref, atol=1e-3, rtol=1e-3), (out, ref)

    # Second shape: exercises the multi-block grid (>= 2 "parallel" steps for
    # v7x's two TensorCores), the larger batch-tile heuristic, and the batch
    # padding / slice-off path.
    B2 = 20
    x2 = jax.random.normal(jax.random.PRNGKey(1), (B2, S, H), dtype=jnp.float32)
    out2 = jax.block_until_ready(atten_forward(x2, w, fc_w, fc_b))
    ref2 = atten_forward_ref(x2, w, fc_w, fc_b)
    assert out2.shape == (B2, C)
    assert jnp.allclose(out2, ref2, atol=1e-3, rtol=1e-3), (out2, ref2)

    print("KERNEL_OK")
</pallas_src>

<mosaic_0001>
module attributes {stable_mosaic.version = 11 : i64} {
  func.func @atten_kernel(%arg0: i32, %arg1: memref<2x8x32xf32, #tpu.memory_space<vmem>>, %arg2: memref<32x1xf32, #tpu.memory_space<vmem>>, %arg3: memref<32x4xf32, #tpu.memory_space<vmem>>, %arg4: memref<1x4xf32, #tpu.memory_space<vmem>>, %arg5: memref<2x4xf32, #tpu.memory_space<vmem>>) attributes {dimension_semantics = [#tpu.dimension_semantics<parallel>], iteration_bounds = array<i64: 1>, scalar_prefetch = 0 : i64, scratch_operands = 0 : i64, tpu.core_type = #tpu.core_type<tc>, window_params = [{transform_indices = @transform_0, window_bounds = array<i64: 2, 8, 32>}, {pipeline_mode = #tpu.pipeline_mode<synchronous>, transform_indices = @transform_1, window_bounds = array<i64: 32, 1>}, {pipeline_mode = #tpu.pipeline_mode<synchronous>, transform_indices = @transform_2, window_bounds = array<i64: 32, 4>}, {pipeline_mode = #tpu.pipeline_mode<synchronous>, transform_indices = @transform_3, window_bounds = array<i64: 1, 4>}, {transform_indices = @transform_4, window_bounds = array<i64: 2, 4>}]} {
    %c0 = arith.constant 0 : index
    %c0_0 = arith.constant 0 : index
    %c0_1 = arith.constant 0 : index
    %0 = vector.load %arg1[%c0, %c0_0, %c0_1] : memref<2x8x32xf32, #tpu.memory_space<vmem>>, vector<2x8x32xf32>
    %1 = math.tanh %0 : vector<2x8x32xf32>
    %2 = vector.shape_cast %1 : vector<2x8x32xf32> to vector<16x32xf32>
    %c0_2 = arith.constant 0 : index
    %c0_3 = arith.constant 0 : index
    %3 = vector.load %arg2[%c0_2, %c0_3] : memref<32x1xf32, #tpu.memory_space<vmem>>, vector<32x1xf32>
    %cst = arith.constant dense<0.000000e+00> : vector<16x1xf32>
    %4 = tpu.matmul %2, %3, %cst {dimension_numbers = #tpu.dot_dimension_numbers<[1], [0], [0], [1], [0, 0, 1, 1], [], []>} : vector<16x32xf32>, vector<32x1xf32>, vector<16x1xf32> -> vector<16x1xf32>
    %5 = vector.shape_cast %4 : vector<16x1xf32> to vector<2x8x1xf32>
    %cst_4 = arith.constant dense<0xFF800000> : vector<2x1xf32>
    %6 = vector.multi_reduction <maximumf>, %5, %cst_4 [1] : vector<2x8x1xf32> to vector<2x1xf32>
    %7 = vector.shape_cast %6 : vector<2x1xf32> to vector<2x1x1xf32>
    %8 = vector.broadcast %7 : vector<2x1x1xf32> to vector<2x8x1xf32>
    %9 = arith.subf %5, %8 : vector<2x8x1xf32>
    %10 = math.exp %9 : vector<2x8x1xf32>
    %cst_5 = arith.constant dense<0.000000e+00> : vector<2x1xf32>
    %11 = vector.multi_reduction <add>, %10, %cst_5 [1] : vector<2x8x1xf32> to vector<2x1xf32>
    %12 = vector.shape_cast %11 : vector<2x1xf32> to vector<2x1x1xf32>
    %13 = vector.broadcast %12 : vector<2x1x1xf32> to vector<2x8x1xf32>
    %14 = arith.divf %10, %13 : vector<2x8x1xf32>
    %15 = vector.broadcast %14 : vector<2x8x1xf32> to vector<2x8x32xf32>
    %16 = arith.mulf %0, %15 : vector<2x8x32xf32>
    %cst_6 = arith.constant dense<0.000000e+00> : vector<2x32xf32>
    %17 = vector.multi_reduction <add>, %16, %cst_6 [1] : vector<2x8x32xf32> to vector<2x32xf32>
    %cst_7 = arith.constant 0.000000e+00 : f32
    %18 = vector.broadcast %cst_7 : f32 to vector<2x32xf32>
    %19 = arith.maximumf %17, %18 : vector<2x32xf32>
    %c0_8 = arith.constant 0 : index
    %c0_9 = arith.constant 0 : index
    %20 = vector.load %arg3[%c0_8, %c0_9] : memref<32x4xf32, #tpu.memory_space<vmem>>, vector<32x4xf32>
    %cst_10 = arith.constant dense<0.000000e+00> : vector<2x4xf32>
    %21 = tpu.matmul %19, %20, %cst_10 {dimension_numbers = #tpu.dot_dimension_numbers<[1], [0], [0], [1], [0, 0, 1, 1], [], []>} : vector<2x32xf32>, vector<32x4xf32>, vector<2x4xf32> -> vector<2x4xf32>
    %c0_11 = arith.constant 0 : index
    %c0_12 = arith.constant 0 : index
    %22 = vector.load %arg4[%c0_11, %c0_12] : memref<1x4xf32, #tpu.memory_space<vmem>>, vector<1x4xf32>
    %23 = vector.broadcast %22 : vector<1x4xf32> to vector<2x4xf32>
    %24 = arith.addf %21, %23 : vector<2x4xf32>
    %c0_13 = arith.constant 0 : index
    %c0_14 = arith.constant 0 : index
    %25 = vector.load %arg5[%c0_13, %c0_14] : memref<2x4xf32, #tpu.memory_space<vmem>>, vector<2x4xf32>
    tpu.vector_store %arg5[%c0_13, %c0_14], %24 {strides = array<i32>} : memref<2x4xf32, #tpu.memory_space<vmem>>, vector<2x4xf32>,
    return
  }
  func.func @transform_0(%arg0: i32) -> (i32, i32, i32) {
    %c0_i32 = arith.constant 0 : i32
    %c0_i32_0 = arith.constant 0 : i32
    %c0_i32_1 = arith.constant 0 : i32
    return %arg0, %c0_i32, %c0_i32_0 : i32, i32, i32
  }
  func.func @transform_1(%arg0: i32) -> (i32, i32) {
    %c0_i32 = arith.constant 0 : i32
    %c0_i32_0 = arith.constant 0 : i32
    %c0_i32_1 = arith.constant 0 : i32
    return %c0_i32, %c0_i32_0 : i32, i32
  }
  func.func @transform_2(%arg0: i32) -> (i32, i32) {
    %c0_i32 = arith.constant 0 : i32
    %c0_i32_0 = arith.constant 0 : i32
    %c0_i32_1 = arith.constant 0 : i32
    return %c0_i32, %c0_i32_0 : i32, i32
  }
  func.func @transform_3(%arg0: i32) -> (i32, i32) {
    %c0_i32 = arith.constant 0 : i32
    %c0_i32_0 = arith.constant 0 : i32
    %c0_i32_1 = arith.constant 0 : i32
    return %c0_i32, %c0_i32_0 : i32, i32
  }
  func.func @transform_4(%arg0: i32) -> (i32, i32) {
    %c0_i32 = arith.constant 0 : i32
    %c0_i32_0 = arith.constant 0 : i32
    return %arg0, %c0_i32 : i32, i32
  }
}

</mosaic_0001>

<llo_original>
// kernel: tpu_custom_call.1
$region0: #{tpu_custom_call.1}
  #allocation0 [shape = 'u32[]', space=smem, size = 0x4, offset = 0x4, fixed_abs, tag = 'smem constant byte address 0x4 - core index']
  #allocation1 [shape = 'u32[72,128]{1,0:T(1,128)}', space=vmem, size = 0x9000, scoped, tag = 'internal scratch']
  %s0 = inlined_call_operand.vmem [shape: f32[2,8,32], index: 0, kind: input, shape index: {}]
  %s1 = inlined_call_operand.vmem [shape: f32[32,1], index: 1, kind: input, shape index: {}]
  %s2 = inlined_call_operand.vmem [shape: f32[32,4], index: 2, kind: input, shape index: {}]
  %s3 = inlined_call_operand.vmem [shape: f32[1,4], index: 3, kind: input, shape index: {}]
  %s4 = inlined_call_operand.hbm [shape: f32[2,4], index: 4, kind: output, shape index: {}]
  %s5 = sld [smem:[#allocation0]]
  $region26: #{tpu_custom_call.1} parent=0
    _
  %s7 = ssub.s32 1, %s5
  %s8 = scalar_select 0, %s7, %s5
  $region1: #{tpu_custom_call.1} parent=0
    #allocation2 [shape = 'u8[1024]{0}', space=vmem, size = 0x400, scoped, tag = 'output window, operand 0, single buffered']
    #allocation3 [shape = 's32[1]{0}', space=sflag, size = 0x4, scoped, tag = 'scoped memory for tpu_custom_call.1']
    %9 = vsyncpa [#allocation3], 0
    // Predicated region
    $region2: #{tpu_custom_call.1} parent=1 // pred_check
      _
    $region3: #{tpu_custom_call.1} parent=1 // pred_check_branch
      %11 = sbr.rel (0) target = $region5
    $region4: #{tpu_custom_call.1} parent=1 // pred_region
      _
    $region5: #{tpu_custom_call.1} parent=1 // pred_fallthru
      _
    // Predicated region
    $region6: #{tpu_custom_call.1} parent=1 // pred_check
      _
    $region7: #{tpu_custom_call.1} parent=1 // pred_check_branch
      %13 = sbr.rel (0) target = $region9
    $region8: #{tpu_custom_call.1} parent=1 // pred_region
      _
    $region9: #{tpu_custom_call.1} parent=1 // pred_fallthru
      _
    // Predicated region
    $region10: #{tpu_custom_call.1} parent=1 // pred_check
      _
    $region11: #{tpu_custom_call.1} parent=1 // pred_check_branch
      %15 = sbr.rel (0) target = $region13
    $region12: #{tpu_custom_call.1} parent=1 // pred_region
      _
    $region13: #{tpu_custom_call.1} parent=1 // pred_fallthru
      _
    // Predicated region
    $region14: #{tpu_custom_call.1} parent=1 // pred_check
      _
    $region15: #{tpu_custom_call.1} parent=1 // pred_check_branch
      %17 = sbr.rel (0) target = $region17
    $region16: #{tpu_custom_call.1} parent=1 // pred_region
      _
    $region17: #{tpu_custom_call.1} parent=1 // pred_fallthru
      _
    %v18 = vld [vmem:[%s0] sm:$0xff]
    %v19 = vld [vmem:[%s0 + $0x8] sm:$0xff]
    %v20 = vtanh.pop %v18
    %v21 = vtanh.pop %v19
    %v22 = vld [vmem:[%s1] sm:$0xff]
    %v23 = vld [vmem:[%s1 + $0x8] sm:$0xff]
    %v24 = vld [vmem:[%s1 + $0x10] sm:$0xff]
    %v25 = vld [vmem:[%s1 + $0x18] sm:$0xff]
    %vm26 = vcmask 261120
    %v28 = vsel %vm26, %v20, 0
    %v31 = vsel %vm26, %v21, 0
    %33 = vmatpush.msra.mxu0 0.0
    %34 = vmatpush.msra.mxu0 0.0
    %35 = vmatpush.msra.mxu0 0.0
    %36 = vmatpush.msra.mxu0 0.0
    %37 = vmatpush.msra.mxu0 0.0
    %38 = vmatpush.msra.mxu0 0.0
    %39 = vmatpush.msra.mxu0 0.0
    %40 = vmatpush.msra.mxu0 0.0
    %41 = vmatpush.msra.mxu0 0.0
    %42 = vmatpush.msra.mxu0 0.0
    %43 = vmatpush.msra.mxu0 0.0
    %44 = vmatpush.msra.mxu0 0.0
    %45 = vmatpush.msra.mxu0 %v25
    %46 = vmatpush.msra.mxu0 %v24
    %47 = vmatpush.msra.mxu0 %v23
    %48 = vmatpush.msra.mxu0 %v22
    %49 = vmatmul.f32.gmra.mxu0 %v28
    %v50 = vpop.f32.mrf.mxu0
    %v51 = vadd.f32 0.0, %v50
    %52 = vmatmul.f32.gmra.mxu0 %v31
    %v53 = vpop.f32.mrf.mxu0
    %v54 = vadd.f32 0.0, %v53
    %55 = vdwg.mxu0
    %vm56 = vcmask 7168
    %v57 = vsel %vm56, %v51, -inf
    %v58 = vrot.slane %v57, 4
    %v59 = vmax.f32 %v57, %v58
    %v60 = vrot.slane %v59, 2
    %v61 = vmax.f32 %v59, %v60
    %v62 = vrot.slane %v61, 1
    %v63 = vmax.f32 %v61, %v62
    %v64 = vsel %vm56, %v54, -inf
    %v65 = vrot.slane %v64, 4
    %v66 = vmax.f32 %v64, %v65
    %v67 = vrot.slane %v66, 2
    %v68 = vmax.f32 %v66, %v67
    %v69 = vrot.slane %v68, 1
    %v70 = vmax.f32 %v68, %v69
    %v71 = vsub.f32 %v51, %v63
    %v72 = vsub.f32 %v54, %v70
    %v73 = vmul.f32 %v71, 1.442695
    %v74 = vpow.pop %v73
    %v75 = vmul.f32 %v72, 1.442695
    %v76 = vpow.pop %v75
    %v77 = vsel %vm56, %v74, 0.0
    %v78 = vrot.slane %v77, 4
    %v79 = vadd.f32 %v77, %v78
    %v80 = vrot.slane %v79, 2
    %v81 = vadd.f32 %v79, %v80
    %v82 = vrot.slane %v81, 1
    %v83 = vadd.f32 %v81, %v82
    %v84 = vsel %vm56, %v76, 0.0
    %v85 = vrot.slane %v84, 4
    %v86 = vadd.f32 %v84, %v85
    %v87 = vrot.slane %v86, 2
    %v88 = vadd.f32 %v86, %v87
    %v89 = vrot.slane %v88, 1
    %v90 = vadd.f32 %v88, %v89
    %v91 = vrcp.pop %v83
    %v92 = vmul.f32 %v83, %v91
    %v93 = vsub.f32 1.0, %v92
    %v94 = vmul.f32 %v91, %v93
    %v95 = vadd.f32 %v91, %v94
    %vm96 = vweird.f32 %v83
    %vm97 = vweird.f32 %v91
    %vm98 = vmor %vm96, %vm97
    %v99 = vsel %vm98, %v91, %v95
    %v100 = vand.u32 2147483647, %v83
    %vm101 = vcmp.eq.f32.partialorder %v100, 8.507059e+37
    %v102 = vand.u32 %v83, 2147483648
    %v103 = vor.u32 1.1754944e-38, %v102
    %v104 = vsel %vm101, %v103, %v99
    %v105 = vmul.f32 %v74, %v104
    %v106 = vrcp.pop %v90
    %v107 = vmul.f32 %v90, %v106
    %v108 = vsub.f32 1.0, %v107
    %v109 = vmul.f32 %v106, %v108
    %v110 = vadd.f32 %v106, %v109
    %vm111 = vweird.f32 %v90
    %vm112 = vweird.f32 %v106
    %vm113 = vmor %vm111, %vm112
    %v114 = vsel %vm113, %v106, %v110
    %v115 = vand.u32 2147483647, %v90
    %vm116 = vcmp.eq.f32.partialorder %v115, 8.507059e+37
    %v117 = vand.u32 %v90, 2147483648
    %v118 = vor.u32 1.1754944e-38, %v117
    %v119 = vsel %vm116, %v118, %v114
    %v120 = vmul.f32 %v76, %v119
    %122 = vset.pattern.permute.xlu0 0
    %123 = vperm.xlu0 %122, %v105
    %v124 = vpop.permute.xlu0 %123
    %127 = vset.pattern.permute.xlu0 0
    %128 = vperm.xlu0 %127, %v120
    %v129 = vpop.permute.xlu0 %128
    %v131 = vmul.f32 %v18, %v124
    %v132 = vmul.f32 %v19, %v129
    %v133 = vsel %vm26, %v131, 0.0
    %v134 = vrot.slane %v133, 4
    %v135 = vadd.f32 %v133, %v134
    %v136 = vrot.slane %v135, 2
    %v137 = vadd.f32 %v135, %v136
    %v138 = vrot.slane %v137, 1
    %v139 = vadd.f32 %v137, %v138
    %v140 = vsel %vm26, %v132, 0.0
    %v141 = vrot.slane %v140, 4
    %v142 = vadd.f32 %v140, %v141
    %v143 = vrot.slane %v142, 2
    %v144 = vadd.f32 %v142, %v143
    %v145 = vrot.slane %v144, 1
    %v146 = vadd.f32 %v144, %v145
    %v147 = vmax.f32 %v139, 0.0
    %v148 = vmax.f32 %v146, 0.0
    %v149 = vld [vmem:[%s2] sm:$0xff]
    %v150 = vld [vmem:[%s2 + $0x8] sm:$0xff]
    %v151 = vld [vmem:[%s2 + $0x10] sm:$0xff]
    %v152 = vld [vmem:[%s2 + $0x18] sm:$0xff]
    %v153 = vld [vmem:[%s3] sm:$0x1]
    %v155 = vperm.slane %v153, 0
    %vm159 = vcmask 1041409
    %v160 = vsel %vm159, %v148, %v147
    %v161 = vsel %vm26, %v160, 0
    %163 = vmatpush.msra.mxu0 0.0
    %164 = vmatpush.msra.mxu0 0.0
    %165 = vmatpush.msra.mxu0 0.0
    %166 = vmatpush.msra.mxu0 0.0
    %167 = vmatpush.msra.mxu0 0.0
    %168 = vmatpush.msra.mxu0 0.0
    %169 = vmatpush.msra.mxu0 0.0
    %170 = vmatpush.msra.mxu0 0.0
    %171 = vmatpush.msra.mxu0 0.0
    %172 = vmatpush.msra.mxu0 0.0
    %173 = vmatpush.msra.mxu0 0.0
    %174 = vmatpush.msra.mxu0 0.0
    %175 = vmatpush.msra.mxu0 %v152
    %176 = vmatpush.msra.mxu0 %v151
    %177 = vmatpush.msra.mxu0 %v150
    %178 = vmatpush.msra.mxu0 %v149
    %179 = vmatmul.f32.gmra.mxu0 %v161
    %v180 = vpop.f32.mrf.mxu0
    %v181 = vadd.f32 %v155, %v180
    %182 = vdwg.mxu0
    %vm183 = vcmask 25600
    %184 = vst.msk [vmem:[#allocation2] sm:$0x3] %vm183, %v181
    // Predicated region
    $region18: #{tpu_custom_call.1} parent=1 // pred_check
      _
    $region19: #{tpu_custom_call.1} parent=1 // pred_check_branch
      %186 = sbr.rel (0) target = $region21
    $region20: #{tpu_custom_call.1} parent=1 // pred_region
      %188 = vsyncadd [#allocation3], 0
      %s190 = sshll.u32 [#allocation2], 4
      %s191 = int_to_ptr.vmem [resolvable:$true] %s190
      %s192 = sshll.u32 %s4, 4
      %s193 = int_to_ptr.hbm [resolvable:$true] %s192
      %195 = dma.vmem_to_hbm [thread:$0]  %s191, 32, %s193, [#allocation3]
    $region21: #{tpu_custom_call.1} parent=1 // pred_fallthru
      _
    // Predicated region
    $region22: #{tpu_custom_call.1} parent=1 // pred_check
      _
    $region23: #{tpu_custom_call.1} parent=1 // pred_check_branch
      %197 = sbr.rel (0) target = $region25
    $region24: #{tpu_custom_call.1} parent=1 // pred_region
      %199 = dma.done [#allocation3], 32
    $region25: #{tpu_custom_call.1} parent=1 // pred_fallthru
      _
    %200 = vsyncpa [#allocation3], 1

</llo_original>
